<compile_context>
chip_gen: v7x
topology: tpu7x:2x2x1
jax: 0.10.0
libtpu: 0.0.40
codegen_flags: <defaults>
</compile_context>

<pallas_src>
import functools

import jax
import jax.numpy as jnp
from jax.experimental import pallas as pl
from jax.experimental.pallas import tpu as pltpu

_LANE = 128


def _round_up(x, m):
    return (x + m - 1) // m * m


def _vmem_limit_bytes(working_set_bytes):
    """Generation-aware scoped-VMEM limit: enough for the (double-buffered) working
    set, capped at 3/4 of the physical per-core VMEM (64 MiB v7x, 128 MiB v5e/v6e)."""
    try:
        cap = int(pltpu.get_tpu_info().vmem_capacity_bytes)
    except Exception:
        cap = 64 * 1024 * 1024
    want = int(working_set_bytes) + (8 << 20)
    return int(max(32 << 20, min(want, cap * 3 // 4)))


# ---------------------------------------------------------------------------
# Phase 1: fused conv (K*K tap loop of bf16 MXU matmuls, f32 accumulation) plus
# per-image masked sum / sum-of-squares partials for training-mode BatchNorm.
# The conv tile is stored channel-major (Cout, OH*W_in) in bf16.
# ---------------------------------------------------------------------------
def _conv_stats_kernel(x_ref, w_ref, valid_ref, conv_ref, sum_ref, sumsq_ref,
                       *, k, w_in):
    rows = conv_ref.shape[2]              # OH * W_in (includes K-1 garbage cols/row)
    acc = None
    for t in range(k * k):                # static unroll over filter taps
        kh, kw = divmod(t, k)
        off = kh * w_in + kw
        win = x_ref[0, :, off:off + rows]                     # (Cin_p, rows) bf16
        part = jnp.dot(w_ref[t], win,                          # (Cout, rows) f32
                       preferred_element_type=jnp.float32)
        acc = part if acc is None else acc + part

    # bf16 channel-major intermediate (lane dim = flattened spatial -> lane-dense).
    conv_ref[0] = acc.astype(conv_ref.dtype)

    # Exact BN partials from the f32 accumulator (before the bf16 cast), masked to
    # valid output columns.  Sublane/lane reductions ride the XLU beside the MXU.
    vm = valid_ref[...]                                        # (1, rows) of {0., 1.}
    masked = acc * vm
    sum_ref[0] = jnp.sum(masked, axis=1, keepdims=True)
    sumsq_ref[0] = jnp.sum(masked * acc, axis=1, keepdims=True)


# ---------------------------------------------------------------------------
# Phase 2: y = conv * scale + shift ; ReLU.  (scale/shift fold gamma, beta, mean
# and rsqrt(var+eps), computed once in the wrapper from the global statistics.)
# ---------------------------------------------------------------------------
def _bn_relu_kernel(conv_ref, scale_ref, shift_ref, out_ref):
    y = conv_ref[...].astype(jnp.float32) * scale_ref[...] + shift_ref[...]
    out_ref[...] = jnp.maximum(y, 0.0)
    # TODO(synk): only the module's default NL='ReLU' activation is implemented.


def block_conv_forward(x, weight, gamma, beta, *, kernel=3, stride=1,
                       padding=0, bn=True, eps=1e-3):
    """blockConv forward.  x: [N, Cin, H, W] (NCHW), weight: [Cout, Cin, K, K]."""
    if stride != 1:
        # TODO(synk): stride>1 needs lane-strided tap windows / a strided column mask.
        raise NotImplementedError("block_conv_forward: only stride=1 is supported")
    n, cin, h, w = x.shape
    cout = weight.shape[0]
    k = kernel
    if padding:
        x = jnp.pad(x, ((0, 0), (0, 0), (padding, padding), (padding, padding)))
    h_in, w_in = h + 2 * padding, w + 2 * padding
    oh = h_in - k + 1
    ow = w_in - k + 1
    rows = oh * w_in                       # full-width conv rows (garbage cols masked)
    hw = h_in * w_in
    hw_pad = _round_up(hw + k - 1, _LANE)  # zero halo so the last tap window is in-bounds
    cin_p = _round_up(cin, 16)             # bf16 sublane tile; no-op for Cin >= 16

    # Input stays NCHW, just flattened + halo'ed + cast: read exactly once by phase 1.
    x_flat = x.reshape(n, cin, hw).astype(jnp.bfloat16)
    x_flat = jnp.pad(x_flat, ((0, 0), (0, cin_p - cin), (0, hw_pad - hw)))

    # Per-tap weight stack (K*K, Cout, Cin_p); resident in VMEM for the whole grid.
    w_stack = weight.astype(jnp.bfloat16).transpose(2, 3, 0, 1).reshape(k * k, cout, cin)
    w_stack = jnp.pad(w_stack, ((0, 0), (0, 0), (0, cin_p - cin)))

    # Column c of the full-width result is output (i, j) with j = c % W_in; only
    # j < OW are real conv outputs and may contribute to the batch statistics.
    valid = (jnp.arange(rows, dtype=jnp.int32) % w_in < ow)
    valid = valid.astype(jnp.float32).reshape(1, rows)

    ws1 = (2 * (cin_p * hw_pad * 2 + k * k * cout * cin_p * 2 + rows * 4
                + cout * rows * 2 + 2 * cout * 4)
           + (cout + cin_p) * rows * 4)                     # live f32 accumulator etc.
    flops1 = 2 * n * k * k * cin_p * cout * rows
    bytes1 = (n * (cin_p * hw_pad * 2 + cout * rows * 2 + 2 * cout * 4)
              + k * k * cout * cin_p * 2 + rows * 4)

    conv_cm, psum, psumsq = pl.pallas_call(
        functools.partial(_conv_stats_kernel, k=k, w_in=w_in),
        grid=(n,),
        in_specs=[
            pl.BlockSpec((1, cin_p, hw_pad), lambda i: (i, 0, 0)),
            pl.BlockSpec((k * k, cout, cin_p), lambda i: (0, 0, 0)),
            pl.BlockSpec((1, rows), lambda i: (0, 0)),
        ],
        out_specs=(
            pl.BlockSpec((1, cout, rows), lambda i: (i, 0, 0)),
            pl.BlockSpec((1, cout, 1), lambda i: (i, 0, 0)),
            pl.BlockSpec((1, cout, 1), lambda i: (i, 0, 0)),
        ),
        out_shape=(
            jax.ShapeDtypeStruct((n, cout, rows), jnp.bfloat16),
            jax.ShapeDtypeStruct((n, cout, 1), jnp.float32),
            jax.ShapeDtypeStruct((n, cout, 1), jnp.float32),
        ),
        compiler_params=pltpu.CompilerParams(
            dimension_semantics=("parallel",),   # per-image partials -> both TCs on v7x
            vmem_limit_bytes=_vmem_limit_bytes(ws1)),
        cost_estimate=pl.CostEstimate(flops=flops1, transcendentals=0,
                                      bytes_accessed=bytes1),
    )(x_flat, w_stack, valid)

    # Fold the exact global (training-mode, biased) batch statistics into scale/shift.
    m_total = n * oh * ow
    if bn:
        csum = jnp.sum(psum[:, :, 0], axis=0)
        csumsq = jnp.sum(psumsq[:, :, 0], axis=0)
        mean = csum / m_total
        var = jnp.maximum(csumsq / m_total - mean * mean, 0.0)
        inv_std = jax.lax.rsqrt(var + eps)
        scale = gamma.astype(jnp.float32) * inv_std
        shift = beta.astype(jnp.float32) - mean * scale
    else:
        scale = jnp.ones((cout,), jnp.float32)
        shift = jnp.zeros((cout,), jnp.float32)
    scale = scale.reshape(cout, 1)
    shift = shift.reshape(cout, 1)

    ws2 = 2 * (cout * rows * 2 + 2 * cout * 4 + cout * rows * 4)
    flops2 = 3 * n * cout * rows
    bytes2 = n * cout * rows * (2 + 4) + 2 * cout * 4

    out_cm = pl.pallas_call(
        _bn_relu_kernel,
        grid=(n,),
        in_specs=[
            pl.BlockSpec((1, cout, rows), lambda i: (i, 0, 0)),
            pl.BlockSpec((cout, 1), lambda i: (0, 0)),
            pl.BlockSpec((cout, 1), lambda i: (0, 0)),
        ],
        out_specs=pl.BlockSpec((1, cout, rows), lambda i: (i, 0, 0)),
        out_shape=jax.ShapeDtypeStruct((n, cout, rows), jnp.float32),
        compiler_params=pltpu.CompilerParams(
            dimension_semantics=("parallel",),
            vmem_limit_bytes=_vmem_limit_bytes(ws2)),
        cost_estimate=pl.CostEstimate(flops=flops2, transcendentals=0,
                                      bytes_accessed=bytes2),
    )(conv_cm, scale, shift)

    # Output is already channel-major (NCHW order): the reshape is free and the crop
    # of the K-1 garbage columns per row is a single fusable XLA slice (no transpose).
    out = out_cm.reshape(n, cout, oh, w_in)[:, :, :, :ow]
    return out


def _reference(x, weight, gamma, beta, eps=1e-3):
    y = jax.lax.conv_general_dilated(
        x.astype(jnp.float32), weight.astype(jnp.float32),
        window_strides=(1, 1), padding="VALID",
        dimension_numbers=("NCHW", "OIHW", "NCHW"))
    mean = jnp.mean(y, axis=(0, 2, 3), keepdims=True)
    var = jnp.mean((y - mean) ** 2, axis=(0, 2, 3), keepdims=True)
    yhat = (y - mean) * jax.lax.rsqrt(var + eps)
    yhat = yhat * gamma.reshape(1, -1, 1, 1) + beta.reshape(1, -1, 1, 1)
    return jnp.maximum(yhat, 0.0)


if __name__ == "__main__":
    key = jax.random.PRNGKey(0)
    kx, kw, kg, kb = jax.random.split(key, 4)

    N, CIN, COUT, H, W, K = 2, 4, 8, 16, 16, 3
    x = jax.random.normal(kx, (N, CIN, H, W), dtype=jnp.float32)
    # Conv2d weight (bias=False).
    weight = jax.random.normal(kw, (COUT, CIN, K, K), dtype=jnp.float32) * 0.1
    # BatchNorm2d affine parameters (non-trivial values to exercise the affine path).
    gamma = 1.0 + 0.1 * jax.random.normal(kg, (COUT,), dtype=jnp.float32)
    beta = 0.1 * jax.random.normal(kb, (COUT,), dtype=jnp.float32)

    out = block_conv_forward(x, weight, gamma, beta, kernel=K)
    jax.block_until_ready(out)

    ref = _reference(x, weight, gamma, beta)
    assert out.shape == (N, COUT, H - K + 1, W - K + 1), out.shape
    # Tolerance reflects the intentional bf16 MXU inputs / bf16 intermediate.
    assert jnp.allclose(out, ref, atol=7e-2, rtol=2e-2), float(jnp.max(jnp.abs(out - ref)))
    print("KERNEL_OK")
</pallas_src>

<mosaic_0001>
module attributes {stable_mosaic.version = 11 : i64} {
  func.func @_conv_stats_kernel(%arg0: i32, %arg1: memref<1x16x384xbf16, #tpu.memory_space<vmem>>, %arg2: memref<9x8x16xbf16, #tpu.memory_space<vmem>>, %arg3: memref<1x224xf32, #tpu.memory_space<vmem>>, %arg4: memref<1x8x224xbf16, #tpu.memory_space<vmem>>, %arg5: memref<1x8x1xf32, #tpu.memory_space<vmem>>, %arg6: memref<1x8x1xf32, #tpu.memory_space<vmem>>) attributes {dimension_semantics = [#tpu.dimension_semantics<parallel>], iteration_bounds = array<i64: 2>, scalar_prefetch = 0 : i64, scratch_operands = 0 : i64, tpu.core_type = #tpu.core_type<tc>, window_params = [{transform_indices = @transform_0, window_bounds = array<i64: 1, 16, 384>}, {pipeline_mode = #tpu.pipeline_mode<synchronous>, transform_indices = @transform_1, window_bounds = array<i64: 9, 8, 16>}, {pipeline_mode = #tpu.pipeline_mode<synchronous>, transform_indices = @transform_2, window_bounds = array<i64: 1, 224>}, {transform_indices = @transform_3, window_bounds = array<i64: 1, 8, 224>}, {transform_indices = @transform_4, window_bounds = array<i64: 1, 8, 1>}, {transform_indices = @transform_5, window_bounds = array<i64: 1, 8, 1>}]} {
    %c0 = arith.constant 0 : index
    %c0_0 = arith.constant 0 : index
    %c0_1 = arith.constant 0 : index
    %0 = vector.load %arg1[%c0, %c0_0, %c0_1] : memref<1x16x384xbf16, #tpu.memory_space<vmem>>, vector<1x16x224xbf16>
    %1 = vector.shape_cast %0 : vector<1x16x224xbf16> to vector<16x224xbf16>
    %c0_2 = arith.constant 0 : index
    %c0_3 = arith.constant 0 : index
    %c0_4 = arith.constant 0 : index
    %2 = vector.load %arg2[%c0_2, %c0_3, %c0_4] : memref<9x8x16xbf16, #tpu.memory_space<vmem>>, vector<1x8x16xbf16>
    %3 = vector.shape_cast %2 : vector<1x8x16xbf16> to vector<8x16xbf16>
    %cst = arith.constant dense<0.000000e+00> : vector<8x224xf32>
    %4 = tpu.matmul %3, %1, %cst {dimension_numbers = #tpu.dot_dimension_numbers<[1], [0], [0], [1], [0, 0, 1, 1], [], []>} : vector<8x16xbf16>, vector<16x224xbf16>, vector<8x224xf32> -> vector<8x224xf32>
    %c0_5 = arith.constant 0 : index
    %c0_6 = arith.constant 0 : index
    %c1 = arith.constant 1 : index
    %5 = vector.load %arg1[%c0_5, %c0_6, %c1] : memref<1x16x384xbf16, #tpu.memory_space<vmem>>, vector<1x16x224xbf16>
    %6 = vector.shape_cast %5 : vector<1x16x224xbf16> to vector<16x224xbf16>
    %c1_7 = arith.constant 1 : index
    %c0_8 = arith.constant 0 : index
    %c0_9 = arith.constant 0 : index
    %7 = vector.load %arg2[%c1_7, %c0_8, %c0_9] : memref<9x8x16xbf16, #tpu.memory_space<vmem>>, vector<1x8x16xbf16>
    %8 = vector.shape_cast %7 : vector<1x8x16xbf16> to vector<8x16xbf16>
    %cst_10 = arith.constant dense<0.000000e+00> : vector<8x224xf32>
    %9 = tpu.matmul %8, %6, %cst_10 {dimension_numbers = #tpu.dot_dimension_numbers<[1], [0], [0], [1], [0, 0, 1, 1], [], []>} : vector<8x16xbf16>, vector<16x224xbf16>, vector<8x224xf32> -> vector<8x224xf32>
    %10 = arith.addf %4, %9 : vector<8x224xf32>
    %c0_11 = arith.constant 0 : index
    %c0_12 = arith.constant 0 : index
    %c2 = arith.constant 2 : index
    %11 = vector.load %arg1[%c0_11, %c0_12, %c2] : memref<1x16x384xbf16, #tpu.memory_space<vmem>>, vector<1x16x224xbf16>
    %12 = vector.shape_cast %11 : vector<1x16x224xbf16> to vector<16x224xbf16>
    %c2_13 = arith.constant 2 : index
    %c0_14 = arith.constant 0 : index
    %c0_15 = arith.constant 0 : index
    %13 = vector.load %arg2[%c2_13, %c0_14, %c0_15] : memref<9x8x16xbf16, #tpu.memory_space<vmem>>, vector<1x8x16xbf16>
    %14 = vector.shape_cast %13 : vector<1x8x16xbf16> to vector<8x16xbf16>
    %cst_16 = arith.constant dense<0.000000e+00> : vector<8x224xf32>
    %15 = tpu.matmul %14, %12, %cst_16 {dimension_numbers = #tpu.dot_dimension_numbers<[1], [0], [0], [1], [0, 0, 1, 1], [], []>} : vector<8x16xbf16>, vector<16x224xbf16>, vector<8x224xf32> -> vector<8x224xf32>
    %16 = arith.addf %10, %15 : vector<8x224xf32>
    %c0_17 = arith.constant 0 : index
    %c0_18 = arith.constant 0 : index
    %c16 = arith.constant 16 : index
    %17 = vector.load %arg1[%c0_17, %c0_18, %c16] : memref<1x16x384xbf16, #tpu.memory_space<vmem>>, vector<1x16x224xbf16>
    %18 = vector.shape_cast %17 : vector<1x16x224xbf16> to vector<16x224xbf16>
    %c3 = arith.constant 3 : index
    %c0_19 = arith.constant 0 : index
    %c0_20 = arith.constant 0 : index
    %19 = vector.load %arg2[%c3, %c0_19, %c0_20] : memref<9x8x16xbf16, #tpu.memory_space<vmem>>, vector<1x8x16xbf16>
    %20 = vector.shape_cast %19 : vector<1x8x16xbf16> to vector<8x16xbf16>
    %cst_21 = arith.constant dense<0.000000e+00> : vector<8x224xf32>
    %21 = tpu.matmul %20, %18, %cst_21 {dimension_numbers = #tpu.dot_dimension_numbers<[1], [0], [0], [1], [0, 0, 1, 1], [], []>} : vector<8x16xbf16>, vector<16x224xbf16>, vector<8x224xf32> -> vector<8x224xf32>
    %22 = arith.addf %16, %21 : vector<8x224xf32>
    %c0_22 = arith.constant 0 : index
    %c0_23 = arith.constant 0 : index
    %c17 = arith.constant 17 : index
    %23 = vector.load %arg1[%c0_22, %c0_23, %c17] : memref<1x16x384xbf16, #tpu.memory_space<vmem>>, vector<1x16x224xbf16>
    %24 = vector.shape_cast %23 : vector<1x16x224xbf16> to vector<16x224xbf16>
    %c4 = arith.constant 4 : index
    %c0_24 = arith.constant 0 : index
    %c0_25 = arith.constant 0 : index
    %25 = vector.load %arg2[%c4, %c0_24, %c0_25] : memref<9x8x16xbf16, #tpu.memory_space<vmem>>, vector<1x8x16xbf16>
    %26 = vector.shape_cast %25 : vector<1x8x16xbf16> to vector<8x16xbf16>
    %cst_26 = arith.constant dense<0.000000e+00> : vector<8x224xf32>
    %27 = tpu.matmul %26, %24, %cst_26 {dimension_numbers = #tpu.dot_dimension_numbers<[1], [0], [0], [1], [0, 0, 1, 1], [], []>} : vector<8x16xbf16>, vector<16x224xbf16>, vector<8x224xf32> -> vector<8x224xf32>
    %28 = arith.addf %22, %27 : vector<8x224xf32>
    %c0_27 = arith.constant 0 : index
    %c0_28 = arith.constant 0 : index
    %c18 = arith.constant 18 : index
    %29 = vector.load %arg1[%c0_27, %c0_28, %c18] : memref<1x16x384xbf16, #tpu.memory_space<vmem>>, vector<1x16x224xbf16>
    %30 = vector.shape_cast %29 : vector<1x16x224xbf16> to vector<16x224xbf16>
    %c5 = arith.constant 5 : index
    %c0_29 = arith.constant 0 : index
    %c0_30 = arith.constant 0 : index
    %31 = vector.load %arg2[%c5, %c0_29, %c0_30] : memref<9x8x16xbf16, #tpu.memory_space<vmem>>, vector<1x8x16xbf16>
    %32 = vector.shape_cast %31 : vector<1x8x16xbf16> to vector<8x16xbf16>
    %cst_31 = arith.constant dense<0.000000e+00> : vector<8x224xf32>
    %33 = tpu.matmul %32, %30, %cst_31 {dimension_numbers = #tpu.dot_dimension_numbers<[1], [0], [0], [1], [0, 0, 1, 1], [], []>} : vector<8x16xbf16>, vector<16x224xbf16>, vector<8x224xf32> -> vector<8x224xf32>
    %34 = arith.addf %28, %33 : vector<8x224xf32>
    %c0_32 = arith.constant 0 : index
    %c0_33 = arith.constant 0 : index
    %c32 = arith.constant 32 : index
    %35 = vector.load %arg1[%c0_32, %c0_33, %c32] : memref<1x16x384xbf16, #tpu.memory_space<vmem>>, vector<1x16x224xbf16>
    %36 = vector.shape_cast %35 : vector<1x16x224xbf16> to vector<16x224xbf16>
    %c6 = arith.constant 6 : index
    %c0_34 = arith.constant 0 : index
    %c0_35 = arith.constant 0 : index
    %37 = vector.load %arg2[%c6, %c0_34, %c0_35] : memref<9x8x16xbf16, #tpu.memory_space<vmem>>, vector<1x8x16xbf16>
    %38 = vector.shape_cast %37 : vector<1x8x16xbf16> to vector<8x16xbf16>
    %cst_36 = arith.constant dense<0.000000e+00> : vector<8x224xf32>
    %39 = tpu.matmul %38, %36, %cst_36 {dimension_numbers = #tpu.dot_dimension_numbers<[1], [0], [0], [1], [0, 0, 1, 1], [], []>} : vector<8x16xbf16>, vector<16x224xbf16>, vector<8x224xf32> -> vector<8x224xf32>
    %40 = arith.addf %34, %39 : vector<8x224xf32>
    %c0_37 = arith.constant 0 : index
    %c0_38 = arith.constant 0 : index
    %c33 = arith.constant 33 : index
    %41 = vector.load %arg1[%c0_37, %c0_38, %c33] : memref<1x16x384xbf16, #tpu.memory_space<vmem>>, vector<1x16x224xbf16>
    %42 = vector.shape_cast %41 : vector<1x16x224xbf16> to vector<16x224xbf16>
    %c7 = arith.constant 7 : index
    %c0_39 = arith.constant 0 : index
    %c0_40 = arith.constant 0 : index
    %43 = vector.load %arg2[%c7, %c0_39, %c0_40] : memref<9x8x16xbf16, #tpu.memory_space<vmem>>, vector<1x8x16xbf16>
    %44 = vector.shape_cast %43 : vector<1x8x16xbf16> to vector<8x16xbf16>
    %cst_41 = arith.constant dense<0.000000e+00> : vector<8x224xf32>
    %45 = tpu.matmul %44, %42, %cst_41 {dimension_numbers = #tpu.dot_dimension_numbers<[1], [0], [0], [1], [0, 0, 1, 1], [], []>} : vector<8x16xbf16>, vector<16x224xbf16>, vector<8x224xf32> -> vector<8x224xf32>
    %46 = arith.addf %40, %45 : vector<8x224xf32>
    %c0_42 = arith.constant 0 : index
    %c0_43 = arith.constant 0 : index
    %c34 = arith.constant 34 : index
    %47 = vector.load %arg1[%c0_42, %c0_43, %c34] : memref<1x16x384xbf16, #tpu.memory_space<vmem>>, vector<1x16x224xbf16>
    %48 = vector.shape_cast %47 : vector<1x16x224xbf16> to vector<16x224xbf16>
    %c8 = arith.constant 8 : index
    %c0_44 = arith.constant 0 : index
    %c0_45 = arith.constant 0 : index
    %49 = vector.load %arg2[%c8, %c0_44, %c0_45] : memref<9x8x16xbf16, #tpu.memory_space<vmem>>, vector<1x8x16xbf16>
    %50 = vector.shape_cast %49 : vector<1x8x16xbf16> to vector<8x16xbf16>
    %cst_46 = arith.constant dense<0.000000e+00> : vector<8x224xf32>
    %51 = tpu.matmul %50, %48, %cst_46 {dimension_numbers = #tpu.dot_dimension_numbers<[1], [0], [0], [1], [0, 0, 1, 1], [], []>} : vector<8x16xbf16>, vector<16x224xbf16>, vector<8x224xf32> -> vector<8x224xf32>
    %52 = arith.addf %46, %51 : vector<8x224xf32>
    %53 = arith.truncf %52 : vector<8x224xf32> to vector<8x224xbf16>
    %c0_47 = arith.constant 0 : index
    %c0_48 = arith.constant 0 : index
    %c0_49 = arith.constant 0 : index
    %54 = vector.load %arg4[%c0_47, %c0_48, %c0_49] : memref<1x8x224xbf16, #tpu.memory_space<vmem>>, vector<1x8x224xbf16>
    %55 = vector.shape_cast %54 : vector<1x8x224xbf16> to vector<8x224xbf16>
    %56 = vector.shape_cast %53 : vector<8x224xbf16> to vector<1x8x224xbf16>
    tpu.vector_store %arg4[%c0_47, %c0_48, %c0_49], %56 {strides = array<i32>} : memref<1x8x224xbf16, #tpu.memory_space<vmem>>, vector<1x8x224xbf16>,
    %c0_50 = arith.constant 0 : index
    %c0_51 = arith.constant 0 : index
    %57 = vector.load %arg3[%c0_50, %c0_51] : memref<1x224xf32, #tpu.memory_space<vmem>>, vector<1x224xf32>
    %58 = vector.broadcast %57 : vector<1x224xf32> to vector<8x224xf32>
    %59 = arith.mulf %52, %58 : vector<8x224xf32>
    %cst_52 = arith.constant dense<0.000000e+00> : vector<8xf32>
    %60 = vector.multi_reduction <add>, %59, %cst_52 [1] : vector<8x224xf32> to vector<8xf32>
    %61 = vector.shape_cast %60 : vector<8xf32> to vector<8x1xf32>
    %c0_53 = arith.constant 0 : index
    %c0_54 = arith.constant 0 : index
    %c0_55 = arith.constant 0 : index
    %62 = vector.load %arg5[%c0_53, %c0_54, %c0_55] : memref<1x8x1xf32, #tpu.memory_space<vmem>>, vector<1x8x1xf32>
    %63 = vector.shape_cast %62 : vector<1x8x1xf32> to vector<8x1xf32>
    %64 = vector.shape_cast %61 : vector<8x1xf32> to vector<1x8x1xf32>
    tpu.vector_store %arg5[%c0_53, %c0_54, %c0_55], %64 {strides = array<i32>} : memref<1x8x1xf32, #tpu.memory_space<vmem>>, vector<1x8x1xf32>,
    %65 = arith.mulf %59, %52 : vector<8x224xf32>
    %cst_56 = arith.constant dense<0.000000e+00> : vector<8xf32>
    %66 = vector.multi_reduction <add>, %65, %cst_56 [1] : vector<8x224xf32> to vector<8xf32>
    %67 = vector.shape_cast %66 : vector<8xf32> to vector<8x1xf32>
    %c0_57 = arith.constant 0 : index
    %c0_58 = arith.constant 0 : index
    %c0_59 = arith.constant 0 : index
    %68 = vector.load %arg6[%c0_57, %c0_58, %c0_59] : memref<1x8x1xf32, #tpu.memory_space<vmem>>, vector<1x8x1xf32>
    %69 = vector.shape_cast %68 : vector<1x8x1xf32> to vector<8x1xf32>
    %70 = vector.shape_cast %67 : vector<8x1xf32> to vector<1x8x1xf32>
    tpu.vector_store %arg6[%c0_57, %c0_58, %c0_59], %70 {strides = array<i32>} : memref<1x8x1xf32, #tpu.memory_space<vmem>>, vector<1x8x1xf32>,
    return
  }
  func.func @transform_0(%arg0: i32) -> (i32, i32, i32) {
    %c0_i32 = arith.constant 0 : i32
    %c0_i32_0 = arith.constant 0 : i32
    %c0_i32_1 = arith.constant 0 : i32
    return %arg0, %c0_i32, %c0_i32_0 : i32, i32, i32
  }
  func.func @transform_1(%arg0: i32) -> (i32, i32, i32) {
    %c0_i32 = arith.constant 0 : i32
    %c0_i32_0 = arith.constant 0 : i32
    %c0_i32_1 = arith.constant 0 : i32
    %c0_i32_2 = arith.constant 0 : i32
    return %c0_i32, %c0_i32_0, %c0_i32_1 : i32, i32, i32
  }
  func.func @transform_2(%arg0: i32) -> (i32, i32) {
    %c0_i32 = arith.constant 0 : i32
    %c0_i32_0 = arith.constant 0 : i32
    %c0_i32_1 = arith.constant 0 : i32
    return %c0_i32, %c0_i32_0 : i32, i32
  }
  func.func @transform_3(%arg0: i32) -> (i32, i32, i32) {
    %c0_i32 = arith.constant 0 : i32
    %c0_i32_0 = arith.constant 0 : i32
    %c0_i32_1 = arith.constant 0 : i32
    return %arg0, %c0_i32, %c0_i32_0 : i32, i32, i32
  }
  func.func @transform_4(%arg0: i32) -> (i32, i32, i32) {
    %c0_i32 = arith.constant 0 : i32
    %c0_i32_0 = arith.constant 0 : i32
    %c0_i32_1 = arith.constant 0 : i32
    return %arg0, %c0_i32, %c0_i32_0 : i32, i32, i32
  }
  func.func @transform_5(%arg0: i32) -> (i32, i32, i32) {
    %c0_i32 = arith.constant 0 : i32
    %c0_i32_0 = arith.constant 0 : i32
    %c0_i32_1 = arith.constant 0 : i32
    return %arg0, %c0_i32, %c0_i32_0 : i32, i32, i32
  }
}

</mosaic_0001>

<llo_original>
// kernel: tpu_custom_call.1
$region0: #{tpu_custom_call.1}
  #allocation0 [shape = 'u32[]', space=smem, size = 0x4, offset = 0x4, fixed_abs, tag = 'smem constant byte address 0x4 - core index']
  #allocation1 [shape = 'u32[144,128]{1,0:T(1,128)}', space=vmem, size = 0x12000, scoped, tag = 'internal scratch']
  %s0 = inlined_call_operand.hbm [shape: bf16[2,16,384], index: 0, kind: input, shape index: {}]
  %s1 = inlined_call_operand.hbm [shape: bf16[9,8,16], index: 1, kind: input, shape index: {}]
  %s2 = inlined_call_operand.vmem [shape: f32[1,224], index: 2, kind: input, shape index: {}]
  %s3 = inlined_call_operand.hbm [shape: bf16[2,8,224], index: 3, kind: output, shape index: {0}]
  %s4 = inlined_call_operand.vmem [shape: f32[2,8,1], index: 4, kind: output, shape index: {1}]
  %s5 = inlined_call_operand.vmem [shape: f32[2,8,1], index: 5, kind: output, shape index: {2}]
  %6 = xla_tuple %s3, %s4, %s5
  %s7 = sld [smem:[#allocation0]]
  $region69: #{tpu_custom_call.1} parent=0
    _
  %s9 = ssub.s32 1, %s7
  %s10 = scalar_select 0, %s9, %s7
  $region1: #{tpu_custom_call.1} parent=0
    #allocation2 [shape = 'u8[24576]{0}', space=vmem, size = 0x6000, scoped, tag = 'input window, operand 0']
    #allocation3 [shape = 's32[2]{0}', space=sflag, size = 0x8, scoped, tag = 'scoped memory for tpu_custom_call.1']
    #allocation4 [shape = 's32[2]{0}', space=sflag, size = 0x8, scoped, tag = 'scoped memory for tpu_custom_call.1']
    #allocation5 [shape = 'u8[18432]{0}', space=vmem, size = 0x4800, scoped, tag = 'input window, operand 1, single buffered']
    #allocation6 [shape = 's32[1]{0}', space=sflag, size = 0x4, scoped, tag = 'scoped memory for tpu_custom_call.1']
    #allocation7 [shape = 'u8[8192]{0}', space=vmem, size = 0x2000, scoped, tag = 'output window, operand 0']
    %11 = vsyncpa [#allocation3], 0
    %s12 = scalar_lea.sflag [#allocation3], 1
    %13 = vsyncpa %s12, 0
    %14 = vsyncpa [#allocation6], 0
    %15 = vsyncpa [#allocation4], 0
    %s16 = scalar_lea.sflag [#allocation4], 1
    %17 = vsyncpa %s16, 0
    loop: start=0, step=1, limit=4
    $region2: #{tpu_custom_call.1} parent=1 // loop_pre_header
      _
    $region3: #{tpu_custom_call.1} parent=1 // loop_header
      %s19 = sphi 0, %s23
      %p20 = scmp.ge.s32.totalorder %s19, 4
      %s29 = sphi 0, %s31
      %s32 = sphi 0, %s29
      %s33 = sphi 0, %s32
      %s49 = sphi 0, %s33
      %s53 = sphi 0, %s53
      %s55 = sphi 0, %s53
      %s56 = sphi 0, %s55
      %s70 = sphi 0, %s56
      %s74 = sphi 0, %s74
      %s76 = sphi 0, %s74
      %s77 = sphi 0, %s76
      %s91 = sphi 0, %s77
      %s97 = sphi 0, %s99
      %s100 = sphi 0, %s97
      %s101 = sphi 0, %s100
      %s117 = sphi 0, %s101
      %s123 = sphi 0, %s125
      %s126 = sphi 0, %s123
      %s127 = sphi 0, %s126
      %s143 = sphi 0, %s127
      %s149 = sphi 0, %s151
      %s152 = sphi 0, %s149
      %s153 = sphi 0, %s152
      %s169 = sphi 0, %s153
    $region4: #{tpu_custom_call.1} parent=1 // loop_header_branch
      %22 = sbr.rel (%p20) target = $region8
    $region5: #{tpu_custom_call.1} parent=1 // loop_body
      %s24 = ssub.s32 %s19, 1
      %s25 = ssub.s32 %s19, 2
      %s26 = sadd.s32 %s19, 1
      %s27 = ssub.s32 %s19, %s26
      %p28 = scmp.eq.s32.totalorder %s27, 0
      %s30 = sadd.s32 %s29, 1
      %s31 = scalar_select %p28, %s29, %s30
      %p34 = pneg %p28
      %p35 = scmp.eq.s32.totalorder %s19, 1
      %p36 = por %p34, %p35
      %p37 = scmp.ne.s32.totalorder %s29, %s32
      %p38 = scmp.eq.s32.totalorder %s19, 0
      %p39 = por %p37, %p38
      %p40 = scmp.ne.s32.totalorder %s29, %s32
      %p41 = scmp.eq.s32.totalorder %s24, 1
      %p42 = por %p40, %p41
      %p43 = scmp.ne.s32.totalorder %s32, %s33
      %p44 = scmp.eq.s32.totalorder %s24, 0
      %p45 = por %p43, %p44
      %p46 = scmp.ne.s32.totalorder %s32, %s33
      %p47 = scmp.eq.s32.totalorder %s25, 1
      %p48 = por %p46, %p47
      %p50 = scmp.ne.s32.totalorder %s33, %s49
      %p51 = scmp.eq.s32.totalorder %s25, 0
      %p52 = por %p50, %p51
      %s54 = sadd.s32 %s53, 1
      %p57 = scmp.eq.s32.totalorder %s19, 1
      %p58 = scmp.ne.s32.totalorder %s53, %s55
      %p59 = scmp.eq.s32.totalorder %s19, 0
      %p60 = por %p58, %p59
      %p61 = scmp.ne.s32.totalorder %s53, %s55
      %p62 = scmp.eq.s32.totalorder %s24, 1
      %p63 = por %p61, %p62
      %p64 = scmp.ne.s32.totalorder %s55, %s56
      %p65 = scmp.eq.s32.totalorder %s24, 0
      %p66 = por %p64, %p65
      %p67 = scmp.ne.s32.totalorder %s55, %s56
      %p68 = scmp.eq.s32.totalorder %s25, 1
      %p69 = por %p67, %p68
      %p71 = scmp.ne.s32.totalorder %s56, %s70
      %p72 = scmp.eq.s32.totalorder %s25, 0
      %p73 = por %p71, %p72
      %s75 = sadd.s32 %s74, 1
      %p78 = scmp.eq.s32.totalorder %s19, 1
      %p79 = scmp.ne.s32.totalorder %s74, %s76
      %p80 = scmp.eq.s32.totalorder %s19, 0
      %p81 = por %p79, %p80
      %p82 = scmp.ne.s32.totalorder %s74, %s76
      %p83 = scmp.eq.s32.totalorder %s24, 1
      %p84 = por %p82, %p83
      %p85 = scmp.ne.s32.totalorder %s76, %s77
      %p86 = scmp.eq.s32.totalorder %s24, 0
      %p87 = por %p85, %p86
      %p88 = scmp.ne.s32.totalorder %s76, %s77
      %p89 = scmp.eq.s32.totalorder %s25, 1
      %p90 = por %p88, %p89
      %p92 = scmp.ne.s32.totalorder %s77, %s91
      %p93 = scmp.eq.s32.totalorder %s25, 0
      %p94 = por %p92, %p93
      %s95 = ssub.s32 %s19, %s26
      %p96 = scmp.eq.s32.totalorder %s95, 0
      %s98 = sadd.s32 %s97, 1
      %s99 = scalar_select %p96, %s97, %s98
      %p102 = pneg %p96
      %p103 = scmp.eq.s32.totalorder %s19, 1
      %p104 = por %p102, %p103
      %p105 = scmp.ne.s32.totalorder %s97, %s100
      %p106 = scmp.eq.s32.totalorder %s19, 0
      %p107 = por %p105, %p106
      %p108 = scmp.ne.s32.totalorder %s97, %s100
      %p109 = scmp.eq.s32.totalorder %s24, 1
      %p110 = por %p108, %p109
      %p111 = scmp.ne.s32.totalorder %s100, %s101
      %p112 = scmp.eq.s32.totalorder %s24, 0
      %p113 = por %p111, %p112
      %p114 = scmp.ne.s32.totalorder %s100, %s101
      %p115 = scmp.eq.s32.totalorder %s25, 1
      %p116 = por %p114, %p115
      %p118 = scmp.ne.s32.totalorder %s101, %s117
      %p119 = scmp.eq.s32.totalorder %s25, 0
      %p120 = por %p118, %p119
      %s121 = ssub.s32 %s19, %s26
      %p122 = scmp.eq.s32.totalorder %s121, 0
      %s124 = sadd.s32 %s123, 1
      %s125 = scalar_select %p122, %s123, %s124
      %p128 = pneg %p122
      %p129 = scmp.eq.s32.totalorder %s19, 1
      %p130 = por %p128, %p129
      %p131 = scmp.ne.s32.totalorder %s123, %s126
      %p132 = scmp.eq.s32.totalorder %s19, 0
      %p133 = por %p131, %p132
      %p134 = scmp.ne.s32.totalorder %s123, %s126
      %p135 = scmp.eq.s32.totalorder %s24, 1
      %p136 = por %p134, %p135
      %p137 = scmp.ne.s32.totalorder %s126, %s127
      %p138 = scmp.eq.s32.totalorder %s24, 0
      %p139 = por %p137, %p138
      %p140 = scmp.ne.s32.totalorder %s126, %s127
      %p141 = scmp.eq.s32.totalorder %s25, 1
      %p142 = por %p140, %p141
      %p144 = scmp.ne.s32.totalorder %s127, %s143
      %p145 = scmp.eq.s32.totalorder %s25, 0
      %p146 = por %p144, %p145
      %s147 = ssub.s32 %s19, %s26
      %p148 = scmp.eq.s32.totalorder %s147, 0
      %s150 = sadd.s32 %s149, 1
      %s151 = scalar_select %p148, %s149, %s150
      %p154 = pneg %p148
      %p155 = scmp.eq.s32.totalorder %s19, 1
      %p156 = por %p154, %p155
      %p157 = scmp.ne.s32.totalorder %s149, %s152
      %p158 = scmp.eq.s32.totalorder %s19, 0
      %p159 = por %p157, %p158
      %p160 = scmp.ne.s32.totalorder %s149, %s152
      %p161 = scmp.eq.s32.totalorder %s24, 1
      %p162 = por %p160, %p161
      %p163 = scmp.ne.s32.totalorder %s152, %s153
      %p164 = scmp.eq.s32.totalorder %s24, 0
      %p165 = por %p163, %p164
      %p166 = scmp.ne.s32.totalorder %s152, %s153
      %p167 = scmp.eq.s32.totalorder %s25, 1
      %p168 = por %p166, %p167
      %p170 = scmp.ne.s32.totalorder %s153, %s169
      %p171 = scmp.eq.s32.totalorder %s25, 0
      %p172 = por %p170, %p171
      %p173 = scmp.le.s32.totalorder 1, %s19
      %p174 = scmp.lt.s32.totalorder %s19, 3
      %p175 = pnand %p173, %p174
      %p176 = pneg %p175
      // Predicated region
      $region9: #{tpu_custom_call.1} parent=5 // pred_check
        _
      $region10: #{tpu_custom_call.1} parent=5 // pred_check_branch
        %178 = sbr.rel (%p175) target = $region12
      $region11: #{tpu_custom_call.1} parent=5 // pred_region
        %s179 = ssub.s32 %s19, 1
        // Predicated region
        $region13: #{tpu_custom_call.1} parent=11 // pred_check
          %p180 = pneg %p66
        $region14: #{tpu_custom_call.1} parent=11 // pred_check_branch
          %182 = sbr.rel (%p180) target = $region16
        $region15: #{tpu_custom_call.1} parent=11 // pred_region
          %s184 = ssub.s32 576, 576
          %185 = vsyncadd [#allocation6], %s184
          %s186 = sshll.u32 [#allocation5], 4
          %s187 = int_to_ptr.vmem [resolvable:$true] %s186
          %192 = dma.hbm_to_vmem [thread:$0]  %s1, 576, %s187, [#allocation6], 64, 64, 4
        $region16: #{tpu_custom_call.1} parent=11 // pred_fallthru
          _
        // Predicated region
        $region17: #{tpu_custom_call.1} parent=11 // pred_check
          %p193 = pneg %p87
        $region18: #{tpu_custom_call.1} parent=11 // pred_check_branch
          %195 = sbr.rel (%p193) target = $region20
        $region19: #{tpu_custom_call.1} parent=11 // pred_region
          _
        $region20: #{tpu_custom_call.1} parent=11 // pred_fallthru
          _
      $region12: #{tpu_custom_call.1} parent=5 // pred_fallthru
        _
      %p196 = scmp.lt.s32.totalorder %s19, 2
      // Predicated region
      $region21: #{tpu_custom_call.1} parent=5 // pred_check
        %p197 = pneg %p196
      $region22: #{tpu_custom_call.1} parent=5 // pred_check_branch
        %199 = sbr.rel (%p197) target = $region24
      $region23: #{tpu_custom_call.1} parent=5 // pred_region
        // Predicated region
        $region25: #{tpu_custom_call.1} parent=23 // pred_check
          %p200 = pneg %p39
        $region26: #{tpu_custom_call.1} parent=23 // pred_check_branch
          %202 = sbr.rel (%p200) target = $region28
        $region27: #{tpu_custom_call.1} parent=23 // pred_region
          %s203 = sand.u32 %s29, 1
          %s204 = scalar_lea.sflag [#allocation3], %s203
          %s205 = sand.u32 %s29, 1
          %s206 = smul.addr %s205, 24
          %s207 = scalar_lea.vmem [#allocation2], %s206
          %s209 = ssub.s32 384, 384
          %210 = vsyncadd %s204, %s209
          %s211 = smul.addr %s19, 6
          %s212 = smul.addr %s211, 64
          %s213 = scalar_lea.hbm %s0, %s212
          %s214 = sshll.u32 %s207, 4
          %s215 = int_to_ptr.vmem [resolvable:$true] %s214
          %220 = dma.hbm_to_vmem [thread:$0]  %s213, 384, %s215, %s204, 192, 192, 12
        $region28: #{tpu_custom_call.1} parent=23 // pred_fallthru
          _
      $region24: #{tpu_custom_call.1} parent=5 // pred_fallthru
        _
      %p221 = scmp.le.s32.totalorder 1, %s19
      %p222 = scmp.lt.s32.totalorder %s19, 3
      %p223 = pnand %p221, %p222
      %p224 = pneg %p223
      // Predicated region
      $region29: #{tpu_custom_call.1} parent=5 // pred_check
        _
      $region30: #{tpu_custom_call.1} parent=5 // pred_check_branch
        %226 = sbr.rel (%p223) target = $region32
      $region31: #{tpu_custom_call.1} parent=5 // pred_region
        %s227 = ssub.s32 %s19, 1
        %s228 = sand.u32 %s32, 1
        %s229 = scalar_lea.sflag [#allocation3], %s228
        %s230 = sand.u32 %s32, 1
        %s231 = smul.addr %s230, 24
        %s232 = scalar_lea.vmem [#allocation2], %s231
        // Predicated region
        $region33: #{tpu_custom_call.1} parent=31 // pred_check
          %p233 = pneg %p45
        $region34: #{tpu_custom_call.1} parent=31 // pred_check_branch
          %235 = sbr.rel (%p233) target = $region36
        $region35: #{tpu_custom_call.1} parent=31 // pred_region
          %236 = dma.done %s229, 384
        $region36: #{tpu_custom_call.1} parent=31 // pred_fallthru
          _
        // Predicated region
        $region37: #{tpu_custom_call.1} parent=31 // pred_check
          %p237 = pneg %p66
        $region38: #{tpu_custom_call.1} parent=31 // pred_check_branch
          %239 = sbr.rel (%p237) target = $region40
        $region39: #{tpu_custom_call.1} parent=31 // pred_region
          %240 = dma.done [#allocation6], 576
        $region40: #{tpu_custom_call.1} parent=31 // pred_fallthru
          _
        %s241 = sand.u32 %s32, 1
        %s242 = scalar_lea.sflag [#allocation3], %s241
        %s243 = sand.u32 %s32, 1
        %s244 = smul.addr %s243, 24
        %s245 = scalar_lea.vmem [#allocation2], %s244
        %p246 = pneg %p45
        %p247 = pneg %p42
        %p248 = pneg %p66
        %p249 = pneg %p63
        %p250 = pneg %p87
        %p251 = pneg %p84
        %p252 = pneg %p113
        %p253 = pneg %p110
        %s254 = sand.u32 %s100, 1
        %s255 = scalar_lea.sflag [#allocation4], %s254
        %s256 = sand.u32 %s100, 1
        %s257 = smul.addr %s256, 8
        %s258 = scalar_lea.vmem [#allocation7], %s257
        %p259 = pneg %p139
        %p260 = pneg %p136
        %p261 = scmp.lt.s32.totalorder %s24, 1
        %s262 = scalar_select %p261, %s24, 1
        %s263 = smul.addr %s262, 8
        %s264 = scalar_lea.vmem %s4, %s263
        %p265 = pneg %p165
        %p266 = pneg %p162
        %p267 = scmp.lt.s32.totalorder %s24, 1
        %s268 = scalar_select %p267, %s24, 1
        %s269 = smul.addr %s268, 8
        %s270 = scalar_lea.vmem %s5, %s269
        %p271 = scmp.lt.s32.totalorder %s24, 1
        %s272 = scalar_select %p271, %s24, 1
        %s273 = smul.addr %s272, 8
        %s274 = scalar_lea.vmem %s4, %s273
        %p275 = scmp.lt.s32.totalorder %s24, 1
        %s276 = scalar_select %p275, %s24, 1
        %s277 = smul.addr %s276, 8
        %s278 = scalar_lea.vmem %s5, %s277
        %v280 = vld [vmem:[%s232] sm:$0xff]
        %v281 = vld [vmem:[%s232 + $0xc] sm:$0xff]
        %v282 = vld [vmem:[#allocation5] sm:$0xf]
        %s283 = scalar_lea.vmem [#allocation5], 4
        %v284 = vld [vmem:[%s283] sm:$0xf]
        %v287 = vunpack.c.l.b16 %v280
        %v288 = vunpack.c.h.b16 %v280
        %v289 = vunpack.c.l.b16 %v281
        %v290 = vunpack.c.h.b16 %v281
        %v291 = vpack.c.b16 %v289, %v287
        %v292 = vpack.c.b16 %v290, %v288
        %293 = vrot.lane.b32.xlu0 %v291, 127
        %v294 = vpop.permute.xlu0 %293
        %295 = vrot.lane.b32.xlu0 %v292, 127
        %v296 = vpop.permute.xlu0 %295
        %vm297 = vcmask 1039360
        %v298 = vsel %vm297, %v294, %v296
        %vm301 = vcmask 130048
        %v303 = vsel %vm301, %v284, 0
        %305 = vmatprep.subr.bf16.mxu0 %v296
        %306 = vmatpush1.bf16.msra.mxu0 %v298
        %307 = vmatprep.subr.bf16.mxu0 0
        %308 = vmatpush1.bf16.msra.mxu0 0
        %309 = vmatprep.subr.bf16.mxu0 0
        %310 = vmatpush1.bf16.msra.mxu0 0
        %311 = vmatprep.subr.bf16.mxu0 0
        %312 = vmatpush1.bf16.msra.mxu0 0
        %313 = vmatprep.subr.bf16.mxu0 0
        %314 = vmatpush1.bf16.msra.mxu0 0
        %315 = vmatprep.subr.bf16.mxu0 0
        %316 = vmatpush1.bf16.msra.mxu0 0
        %317 = vmatprep.subr.bf16.mxu0 0
        %318 = vmatpush1.bf16.msra.mxu0 0
        %319 = vmatprep.subr.bf16.mxu0 0
        %320 = vmatpush1.bf16.msra.mxu0 0
        %321 = vmatprep.subr.bf16.mxu0 0
        %322 = vmatpush1.bf16.msra.mxu0 0
        %323 = vmatprep.subr.bf16.mxu0 0
        %324 = vmatpush1.bf16.msra.mxu0 0
        %325 = vmatprep.subr.bf16.mxu0 0
        %326 = vmatpush1.bf16.msra.mxu0 0
        %327 = vmatprep.subr.bf16.mxu0 0
        %328 = vmatpush1.bf16.msra.mxu0 0
        %329 = vmatprep.subr.bf16.mxu0 0
        %330 = vmatpush1.bf16.msra.mxu0 0
        %331 = vmatprep.subr.bf16.mxu0 0
        %332 = vmatpush1.bf16.msra.mxu0 0
        %333 = vmatprep.subr.bf16.mxu0 0
        %334 = vmatpush1.bf16.msra.mxu0 0
        %335 = vmatprep.subr.bf16.mxu0 0
        %336 = vmatpush1.bf16.msra.mxu0 0
        %337 = vmatprep.mubr.bf16.mxu0 0
        %338 = vmatmul.mubr.bf16.gmra.mrb[0].mxu0 %v303
        %v339 = vpop.f32.mrb[0].mxu0
        %v340 = vadd.f32 0.0, %v339
        %v341 = vpop.f32.mrb[0].mxu0
        %v342 = vadd.f32 0.0, %v341
        %v343 = vpop.f32.mrb[0].mxu0
        %v344 = vpop.f32.mrb[0].mxu0
        %345 = vdwg.mxu0
        %v349 = vsel %vm301, %v282, 0
        %351 = vmatprep.subr.bf16.mxu0 %v292
        %352 = vmatpush1.bf16.msra.mxu0 %v291
        %353 = vmatprep.subr.bf16.mxu0 0
        %354 = vmatpush1.bf16.msra.mxu0 0
        %355 = vmatprep.subr.bf16.mxu0 0
        %356 = vmatpush1.bf16.msra.mxu0 0
        %357 = vmatprep.subr.bf16.mxu0 0
        %358 = vmatpush1.bf16.msra.mxu0 0
        %359 = vmatprep.subr.bf16.mxu0 0
        %360 = vmatpush1.bf16.msra.mxu0 0
        %361 = vmatprep.subr.bf16.mxu0 0
        %362 = vmatpush1.bf16.msra.mxu0 0
        %363 = vmatprep.subr.bf16.mxu0 0
        %364 = vmatpush1.bf16.msra.mxu0 0
        %365 = vmatprep.subr.bf16.mxu0 0
        %366 = vmatpush1.bf16.msra.mxu0 0
        %367 = vmatprep.subr.bf16.mxu0 0
        %368 = vmatpush1.bf16.msra.mxu0 0
        %369 = vmatprep.subr.bf16.mxu0 0
        %370 = vmatpush1.bf16.msra.mxu0 0
        %371 = vmatprep.subr.bf16.mxu0 0
        %372 = vmatpush1.bf16.msra.mxu0 0
        %373 = vmatprep.subr.bf16.mxu0 0
        %374 = vmatpush1.bf16.msra.mxu0 0
        %375 = vmatprep.subr.bf16.mxu0 0
        %376 = vmatpush1.bf16.msra.mxu0 0
        %377 = vmatprep.subr.bf16.mxu0 0
        %378 = vmatpush1.bf16.msra.mxu0 0
        %379 = vmatprep.subr.bf16.mxu0 0
        %380 = vmatpush1.bf16.msra.mxu0 0
        %381 = vmatprep.subr.bf16.mxu0 0
        %382 = vmatpush1.bf16.msra.mxu0 0
        %383 = vmatprep.mubr.bf16.mxu0 0
        %384 = vmatmul.mubr.bf16.gmra.mrb[0].mxu0 %v349
        %v385 = vpop.f32.mrb[0].mxu0
        %v386 = vadd.f32 %v340, %v385
        %v387 = vpop.f32.mrb[0].mxu0
        %v388 = vadd.f32 %v342, %v387
        %v389 = vpop.f32.mrb[0].mxu0
        %v390 = vpop.f32.mrb[0].mxu0
        %391 = vdwg.mxu0
        %s392 = scalar_lea.vmem [#allocation5], 8
        %v393 = vld [vmem:[%s392] sm:$0xf]
        %394 = vrot.lane.b32.xlu0 %v291, 126
        %v395 = vpop.permute.xlu0 %394
        %396 = vrot.lane.b32.xlu0 %v292, 126
        %v397 = vpop.permute.xlu0 %396
        %vm398 = vcmask 1031168
        %v399 = vsel %vm398, %v395, %v397
        %v403 = vsel %vm301, %v393, 0
        %405 = vmatprep.subr.bf16.mxu0 %v397
        %406 = vmatpush1.bf16.msra.mxu0 %v399
        %407 = vmatprep.subr.bf16.mxu0 0
        %408 = vmatpush1.bf16.msra.mxu0 0
        %409 = vmatprep.subr.bf16.mxu0 0
        %410 = vmatpush1.bf16.msra.mxu0 0
        %411 = vmatprep.subr.bf16.mxu0 0
        %412 = vmatpush1.bf16.msra.mxu0 0
        %413 = vmatprep.subr.bf16.mxu0 0
        %414 = vmatpush1.bf16.msra.mxu0 0
        %415 = vmatprep.subr.bf16.mxu0 0
        %416 = vmatpush1.bf16.msra.mxu0 0
        %417 = vmatprep.subr.bf16.mxu0 0
        %418 = vmatpush1.bf16.msra.mxu0 0
        %419 = vmatprep.subr.bf16.mxu0 0
        %420 = vmatpush1.bf16.msra.mxu0 0
        %421 = vmatprep.subr.bf16.mxu0 0
        %422 = vmatpush1.bf16.msra.mxu0 0
        %423 = vmatprep.subr.bf16.mxu0 0
        %424 = vmatpush1.bf16.msra.mxu0 0
        %425 = vmatprep.subr.bf16.mxu0 0
        %426 = vmatpush1.bf16.msra.mxu0 0
        %427 = vmatprep.subr.bf16.mxu0 0
        %428 = vmatpush1.bf16.msra.mxu0 0
        %429 = vmatprep.subr.bf16.mxu0 0
        %430 = vmatpush1.bf16.msra.mxu0 0
        %431 = vmatprep.subr.bf16.mxu0 0
        %432 = vmatpush1.bf16.msra.mxu0 0
        %433 = vmatprep.subr.bf16.mxu0 0
        %434 = vmatpush1.bf16.msra.mxu0 0
        %435 = vmatprep.subr.bf16.mxu0 0
        %436 = vmatpush1.bf16.msra.mxu0 0
        %437 = vmatprep.mubr.bf16.mxu0 0
        %438 = vmatmul.mubr.bf16.gmra.mrb[0].mxu0 %v403
        %v439 = vpop.f32.mrb[0].mxu0
        %v440 = vadd.f32 0.0, %v439
        %v441 = vpop.f32.mrb[0].mxu0
        %v442 = vadd.f32 0.0, %v441
        %v443 = vpop.f32.mrb[0].mxu0
        %v444 = vpop.f32.mrb[0].mxu0
        %445 = vdwg.mxu0
        %v446 = vadd.f32 %v386, %v440
        %v447 = vadd.f32 %v388, %v442
        %s448 = scalar_lea.vmem [#allocation5], 12
        %v449 = vld [vmem:[%s448] sm:$0xf]
        %450 = vrot.lane.b32.xlu0 %v291, 112
        %v451 = vpop.permute.xlu0 %450
        %452 = vrot.lane.b32.xlu0 %v292, 112
        %v453 = vpop.permute.xlu0 %452
        %vm454 = vcmask 916480
        %v455 = vsel %vm454, %v451, %v453
        %v459 = vsel %vm301, %v449, 0
        %461 = vmatprep.subr.bf16.mxu0 %v453
        %462 = vmatpush1.bf16.msra.mxu0 %v455
        %463 = vmatprep.subr.bf16.mxu0 0
        %464 = vmatpush1.bf16.msra.mxu0 0
        %465 = vmatprep.subr.bf16.mxu0 0
        %466 = vmatpush1.bf16.msra.mxu0 0
        %467 = vmatprep.subr.bf16.mxu0 0
        %468 = vmatpush1.bf16.msra.mxu0 0
        %469 = vmatprep.subr.bf16.mxu0 0
        %470 = vmatpush1.bf16.msra.mxu0 0
        %471 = vmatprep.subr.bf16.mxu0 0
        %472 = vmatpush1.bf16.msra.mxu0 0
        %473 = vmatprep.subr.bf16.mxu0 0
        %474 = vmatpush1.bf16.msra.mxu0 0
        %475 = vmatprep.subr.bf16.mxu0 0
        %476 = vmatpush1.bf16.msra.mxu0 0
        %477 = vmatprep.subr.bf16.mxu0 0
        %478 = vmatpush1.bf16.msra.mxu0 0
        %479 = vmatprep.subr.bf16.mxu0 0
        %480 = vmatpush1.bf16.msra.mxu0 0
        %481 = vmatprep.subr.bf16.mxu0 0
        %482 = vmatpush1.bf16.msra.mxu0 0
        %483 = vmatprep.subr.bf16.mxu0 0
        %484 = vmatpush1.bf16.msra.mxu0 0
        %485 = vmatprep.subr.bf16.mxu0 0
        %486 = vmatpush1.bf16.msra.mxu0 0
        %487 = vmatprep.subr.bf16.mxu0 0
        %488 = vmatpush1.bf16.msra.mxu0 0
        %489 = vmatprep.subr.bf16.mxu0 0
        %490 = vmatpush1.bf16.msra.mxu0 0
        %491 = vmatprep.subr.bf16.mxu0 0
        %492 = vmatpush1.bf16.msra.mxu0 0
        %493 = vmatprep.mubr.bf16.mxu0 0
        %494 = vmatmul.mubr.bf16.gmra.mrb[0].mxu0 %v459
        %v495 = vpop.f32.mrb[0].mxu0
        %v496 = vadd.f32 0.0, %v495
        %v497 = vpop.f32.mrb[0].mxu0
        %v498 = vadd.f32 0.0, %v497
        %v499 = vpop.f32.mrb[0].mxu0
        %v500 = vpop.f32.mrb[0].mxu0
        %501 = vdwg.mxu0
        %v502 = vadd.f32 %v446, %v496
        %v503 = vadd.f32 %v447, %v498
        %s504 = scalar_lea.vmem [#allocation5], 16
        %v505 = vld [vmem:[%s504] sm:$0xf]
        %506 = vrot.lane.b32.xlu0 %v291, 111
        %v507 = vpop.permute.xlu0 %506
        %508 = vrot.lane.b32.xlu0 %v292, 111
        %v509 = vpop.permute.xlu0 %508
        %vm510 = vcmask 908288
        %v511 = vsel %vm510, %v507, %v509
        %v515 = vsel %vm301, %v505, 0
        %517 = vmatprep.subr.bf16.mxu0 %v509
        %518 = vmatpush1.bf16.msra.mxu0 %v511
        %519 = vmatprep.subr.bf16.mxu0 0
        %520 = vmatpush1.bf16.msra.mxu0 0
        %521 = vmatprep.subr.bf16.mxu0 0
        %522 = vmatpush1.bf16.msra.mxu0 0
        %523 = vmatprep.subr.bf16.mxu0 0
        %524 = vmatpush1.bf16.msra.mxu0 0
        %525 = vmatprep.subr.bf16.mxu0 0
        %526 = vmatpush1.bf16.msra.mxu0 0
        %527 = vmatprep.subr.bf16.mxu0 0
        %528 = vmatpush1.bf16.msra.mxu0 0
        %529 = vmatprep.subr.bf16.mxu0 0
        %530 = vmatpush1.bf16.msra.mxu0 0
        %531 = vmatprep.subr.bf16.mxu0 0
        %532 = vmatpush1.bf16.msra.mxu0 0
        %533 = vmatprep.subr.bf16.mxu0 0
        %534 = vmatpush1.bf16.msra.mxu0 0
        %535 = vmatprep.subr.bf16.mxu0 0
        %536 = vmatpush1.bf16.msra.mxu0 0
        %537 = vmatprep.subr.bf16.mxu0 0
        %538 = vmatpush1.bf16.msra.mxu0 0
        %539 = vmatprep.subr.bf16.mxu0 0
        %540 = vmatpush1.bf16.msra.mxu0 0
        %541 = vmatprep.subr.bf16.mxu0 0
        %542 = vmatpush1.bf16.msra.mxu0 0
        %543 = vmatprep.subr.bf16.mxu0 0
        %544 = vmatpush1.bf16.msra.mxu0 0
        %545 = vmatprep.subr.bf16.mxu0 0
        %546 = vmatpush1.bf16.msra.mxu0 0
        %547 = vmatprep.subr.bf16.mxu0 0
        %548 = vmatpush1.bf16.msra.mxu0 0
        %549 = vmatprep.mubr.bf16.mxu0 0
        %550 = vmatmul.mubr.bf16.gmra.mrb[0].mxu0 %v515
        %v551 = vpop.f32.mrb[0].mxu0
        %v552 = vadd.f32 0.0, %v551
        %v553 = vpop.f32.mrb[0].mxu0
        %v554 = vadd.f32 0.0, %v553
        %v555 = vpop.f32.mrb[0].mxu0
        %v556 = vpop.f32.mrb[0].mxu0
        %557 = vdwg.mxu0
        %v558 = vadd.f32 %v502, %v552
        %v559 = vadd.f32 %v503, %v554
        %s560 = scalar_lea.vmem [#allocation5], 20
        %v561 = vld [vmem:[%s560] sm:$0xf]
        %562 = vrot.lane.b32.xlu0 %v291, 110
        %v563 = vpop.permute.xlu0 %562
        %564 = vrot.lane.b32.xlu0 %v292, 110
        %v565 = vpop.permute.xlu0 %564
        %vm566 = vcmask 900096
        %v567 = vsel %vm566, %v563, %v565
        %v571 = vsel %vm301, %v561, 0
        %573 = vmatprep.subr.bf16.mxu0 %v565
        %574 = vmatpush1.bf16.msra.mxu0 %v567
        %575 = vmatprep.subr.bf16.mxu0 0
        %576 = vmatpush1.bf16.msra.mxu0 0
        %577 = vmatprep.subr.bf16.mxu0 0
        %578 = vmatpush1.bf16.msra.mxu0 0
        %579 = vmatprep.subr.bf16.mxu0 0
        %580 = vmatpush1.bf16.msra.mxu0 0
        %581 = vmatprep.subr.bf16.mxu0 0
        %582 = vmatpush1.bf16.msra.mxu0 0
        %583 = vmatprep.subr.bf16.mxu0 0
        %584 = vmatpush1.bf16.msra.mxu0 0
        %585 = vmatprep.subr.bf16.mxu0 0
        %586 = vmatpush1.bf16.msra.mxu0 0
        %587 = vmatprep.subr.bf16.mxu0 0
        %588 = vmatpush1.bf16.msra.mxu0 0
        %589 = vmatprep.subr.bf16.mxu0 0
        %590 = vmatpush1.bf16.msra.mxu0 0
        %591 = vmatprep.subr.bf16.mxu0 0
        %592 = vmatpush1.bf16.msra.mxu0 0
        %593 = vmatprep.subr.bf16.mxu0 0
        %594 = vmatpush1.bf16.msra.mxu0 0
        %595 = vmatprep.subr.bf16.mxu0 0
        %596 = vmatpush1.bf16.msra.mxu0 0
        %597 = vmatprep.subr.bf16.mxu0 0
        %598 = vmatpush1.bf16.msra.mxu0 0
        %599 = vmatprep.subr.bf16.mxu0 0
        %600 = vmatpush1.bf16.msra.mxu0 0
        %601 = vmatprep.subr.bf16.mxu0 0
        %602 = vmatpush1.bf16.msra.mxu0 0
        %603 = vmatprep.subr.bf16.mxu0 0
        %604 = vmatpush1.bf16.msra.mxu0 0
        %605 = vmatprep.mubr.bf16.mxu0 0
        %606 = vmatmul.mubr.bf16.gmra.mrb[0].mxu0 %v571
        %v607 = vpop.f32.mrb[0].mxu0
        %v608 = vadd.f32 0.0, %v607
        %v609 = vpop.f32.mrb[0].mxu0
        %v610 = vadd.f32 0.0, %v609
        %v611 = vpop.f32.mrb[0].mxu0
        %v612 = vpop.f32.mrb[0].mxu0
        %613 = vdwg.mxu0
        %v614 = vadd.f32 %v558, %v608
        %v615 = vadd.f32 %v559, %v610
        %s616 = scalar_lea.vmem [#allocation5], 24
        %v617 = vld [vmem:[%s616] sm:$0xf]
        %618 = vrot.lane.b32.xlu0 %v291, 96
        %v619 = vpop.permute.xlu0 %618
        %620 = vrot.lane.b32.xlu0 %v292, 96
        %v621 = vpop.permute.xlu0 %620
        %vm622 = vcmask 785408
        %v623 = vsel %vm622, %v619, %v621
        %v627 = vsel %vm301, %v617, 0
        %629 = vmatprep.subr.bf16.mxu0 %v621
        %630 = vmatpush1.bf16.msra.mxu0 %v623
        %631 = vmatprep.subr.bf16.mxu0 0
        %632 = vmatpush1.bf16.msra.mxu0 0
        %633 = vmatprep.subr.bf16.mxu0 0
        %634 = vmatpush1.bf16.msra.mxu0 0
        %635 = vmatprep.subr.bf16.mxu0 0
        %636 = vmatpush1.bf16.msra.mxu0 0
        %637 = vmatprep.subr.bf16.mxu0 0
        %638 = vmatpush1.bf16.msra.mxu0 0
        %639 = vmatprep.subr.bf16.mxu0 0
        %640 = vmatpush1.bf16.msra.mxu0 0
        %641 = vmatprep.subr.bf16.mxu0 0
        %642 = vmatpush1.bf16.msra.mxu0 0
        %643 = vmatprep.subr.bf16.mxu0 0
        %644 = vmatpush1.bf16.msra.mxu0 0
        %645 = vmatprep.subr.bf16.mxu0 0
        %646 = vmatpush1.bf16.msra.mxu0 0
        %647 = vmatprep.subr.bf16.mxu0 0
        %648 = vmatpush1.bf16.msra.mxu0 0
        %649 = vmatprep.subr.bf16.mxu0 0
        %650 = vmatpush1.bf16.msra.mxu0 0
        %651 = vmatprep.subr.bf16.mxu0 0
        %652 = vmatpush1.bf16.msra.mxu0 0
        %653 = vmatprep.subr.bf16.mxu0 0
        %654 = vmatpush1.bf16.msra.mxu0 0
        %655 = vmatprep.subr.bf16.mxu0 0
        %656 = vmatpush1.bf16.msra.mxu0 0
        %657 = vmatprep.subr.bf16.mxu0 0
        %658 = vmatpush1.bf16.msra.mxu0 0
        %659 = vmatprep.subr.bf16.mxu0 0
        %660 = vmatpush1.bf16.msra.mxu0 0
        %661 = vmatprep.mubr.bf16.mxu0 0
        %662 = vmatmul.mubr.bf16.gmra.mrb[0].mxu0 %v627
        %v663 = vpop.f32.mrb[0].mxu0
        %v664 = vadd.f32 0.0, %v663
        %v665 = vpop.f32.mrb[0].mxu0
        %v666 = vadd.f32 0.0, %v665
        %v667 = vpop.f32.mrb[0].mxu0
        %v668 = vpop.f32.mrb[0].mxu0
        %669 = vdwg.mxu0
        %v670 = vadd.f32 %v614, %v664
        %v671 = vadd.f32 %v615, %v666
        %v672 = vld [vmem:[%s232] sm:$0xff]
        %v673 = vld [vmem:[%s232 + $0x8] sm:$0xf]
        %v674 = vld [vmem:[%s232 + $0xc] sm:$0xff]
        %v675 = vld [vmem:[%s232 + $0x14] sm:$0xf]
        %s676 = scalar_lea.vmem [#allocation5], 28
        %v677 = vld [vmem:[%s676] sm:$0xf]
        %v682 = vunpack.c.l.b16 %v672
        %v683 = vunpack.c.h.b16 %v672
        %v684 = vunpack.c.l.b16 %v673
        %v685 = vunpack.c.l.b16 %v674
        %v686 = vunpack.c.h.b16 %v674
        %v687 = vunpack.c.l.b16 %v675
        %v688 = vpack.c.b16 %v685, %v682
        %v689 = vpack.c.b16 %v686, %v683
        %v690 = vpack.c.b16 %v687, %v684
        %691 = vrot.lane.b32.xlu0 %v688, 95
        %v692 = vpop.permute.xlu0 %691
        %693 = vrot.lane.b32.xlu0 %v689, 95
        %v694 = vpop.permute.xlu0 %693
        %695 = vrot.lane.b32.xlu0 %v690, 95
        %v696 = vpop.permute.xlu0 %695
        %vm697 = vcmask 777216
        %v698 = vsel %vm697, %v692, %v694
        %v699 = vsel %vm697, %v694, %v696
        %v703 = vsel %vm301, %v677, 0
        %705 = vmatprep.subr.bf16.mxu0 %v699
        %706 = vmatpush1.bf16.msra.mxu0 %v698
        %707 = vmatprep.subr.bf16.mxu0 0
        %708 = vmatpush1.bf16.msra.mxu0 0
        %709 = vmatprep.subr.bf16.mxu0 0
        %710 = vmatpush1.bf16.msra.mxu0 0
        %711 = vmatprep.subr.bf16.mxu0 0
        %712 = vmatpush1.bf16.msra.mxu0 0
        %713 = vmatprep.subr.bf16.mxu0 0
        %714 = vmatpush1.bf16.msra.mxu0 0
        %715 = vmatprep.subr.bf16.mxu0 0
        %716 = vmatpush1.bf16.msra.mxu0 0
        %717 = vmatprep.subr.bf16.mxu0 0
        %718 = vmatpush1.bf16.msra.mxu0 0
        %719 = vmatprep.subr.bf16.mxu0 0
        %720 = vmatpush1.bf16.msra.mxu0 0
        %721 = vmatprep.subr.bf16.mxu0 0
        %722 = vmatpush1.bf16.msra.mxu0 0
        %723 = vmatprep.subr.bf16.mxu0 0
        %724 = vmatpush1.bf16.msra.mxu0 0
        %725 = vmatprep.subr.bf16.mxu0 0
        %726 = vmatpush1.bf16.msra.mxu0 0
        %727 = vmatprep.subr.bf16.mxu0 0
        %728 = vmatpush1.bf16.msra.mxu0 0
        %729 = vmatprep.subr.bf16.mxu0 0
        %730 = vmatpush1.bf16.msra.mxu0 0
        %731 = vmatprep.subr.bf16.mxu0 0
        %732 = vmatpush1.bf16.msra.mxu0 0
        %733 = vmatprep.subr.bf16.mxu0 0
        %734 = vmatpush1.bf16.msra.mxu0 0
        %735 = vmatprep.subr.bf16.mxu0 0
        %736 = vmatpush1.bf16.msra.mxu0 0
        %737 = vmatprep.mubr.bf16.mxu0 0
        %738 = vmatmul.mubr.bf16.gmra.mrb[0].mxu0 %v703
        %v739 = vpop.f32.mrb[0].mxu0
        %v740 = vadd.f32 0.0, %v739
        %v741 = vpop.f32.mrb[0].mxu0
        %v742 = vadd.f32 0.0, %v741
        %v743 = vpop.f32.mrb[0].mxu0
        %v744 = vpop.f32.mrb[0].mxu0
        %745 = vdwg.mxu0
        %v746 = vadd.f32 %v670, %v740
        %v747 = vadd.f32 %v671, %v742
        %s748 = scalar_lea.vmem [#allocation5], 32
        %v749 = vld [vmem:[%s748] sm:$0xf]
        %750 = vrot.lane.b32.xlu0 %v688, 94
        %v751 = vpop.permute.xlu0 %750
        %752 = vrot.lane.b32.xlu0 %v689, 94
        %v753 = vpop.permute.xlu0 %752
        %754 = vrot.lane.b32.xlu0 %v690, 94
        %v755 = vpop.permute.xlu0 %754
        %vm756 = vcmask 769024
        %v757 = vsel %vm756, %v751, %v753
        %v758 = vsel %vm756, %v753, %v755
        %v762 = vsel %vm301, %v749, 0
        %764 = vmatprep.subr.bf16.mxu0 %v758
        %765 = vmatpush1.bf16.msra.mxu0 %v757
        %766 = vmatprep.subr.bf16.mxu0 0
        %767 = vmatpush1.bf16.msra.mxu0 0
        %768 = vmatprep.subr.bf16.mxu0 0
        %769 = vmatpush1.bf16.msra.mxu0 0
        %770 = vmatprep.subr.bf16.mxu0 0
        %771 = vmatpush1.bf16.msra.mxu0 0
        %772 = vmatprep.subr.bf16.mxu0 0
        %773 = vmatpush1.bf16.msra.mxu0 0
        %774 = vmatprep.subr.bf16.mxu0 0
        %775 = vmatpush1.bf16.msra.mxu0 0
        %776 = vmatprep.subr.bf16.mxu0 0
        %777 = vmatpush1.bf16.msra.mxu0 0
        %778 = vmatprep.subr.bf16.mxu0 0
        %779 = vmatpush1.bf16.msra.mxu0 0
        %780 = vmatprep.subr.bf16.mxu0 0
        %781 = vmatpush1.bf16.msra.mxu0 0
        %782 = vmatprep.subr.bf16.mxu0 0
        %783 = vmatpush1.bf16.msra.mxu0 0
        %784 = vmatprep.subr.bf16.mxu0 0
        %785 = vmatpush1.bf16.msra.mxu0 0
        %786 = vmatprep.subr.bf16.mxu0 0
        %787 = vmatpush1.bf16.msra.mxu0 0
        %788 = vmatprep.subr.bf16.mxu0 0
        %789 = vmatpush1.bf16.msra.mxu0 0
        %790 = vmatprep.subr.bf16.mxu0 0
        %791 = vmatpush1.bf16.msra.mxu0 0
        %792 = vmatprep.subr.bf16.mxu0 0
        %793 = vmatpush1.bf16.msra.mxu0 0
        %794 = vmatprep.subr.bf16.mxu0 0
        %795 = vmatpush1.bf16.msra.mxu0 0
        %796 = vmatprep.mubr.bf16.mxu0 0
        %797 = vmatmul.mubr.bf16.gmra.mrb[0].mxu0 %v762
        %v798 = vpop.f32.mrb[0].mxu0
        %v799 = vadd.f32 0.0, %v798
        %v800 = vpop.f32.mrb[0].mxu0
        %v801 = vadd.f32 0.0, %v800
        %v802 = vpop.f32.mrb[0].mxu0
        %v803 = vpop.f32.mrb[0].mxu0
        %804 = vdwg.mxu0
        %v805 = vadd.f32 %v746, %v799
        %v806 = vadd.f32 %v747, %v801
        %v807 = vpack.c.bf16 %v805, %v805
        %v808 = vpack.c.bf16 %v806, %v806
        %v811 = vunpack.c.l.b16 %v807
        %v812 = vunpack.c.l.b16 %v808
        %v813 = vpack.c.b16 %v812, %v811
        %vm815 = vcmask 1043456
        %vm816 = vcmask 785412
        %vm817 = vmor %vm816, %vm815
        %818 = vst.msk [vmem:[%s258] sm:$0xff] %vm817, %v813
        %v819 = vld [vmem:[%s2] sm:$0x3]
        %v821 = vlaneseq
        %v822 = vshrl.u32 %v821, 7
        %v823 = vsub.s32 0, %v822
        %v824 = vrot.slane %v819, %v823
        %v825 = vlaneseq
        %v826 = vshrl.u32 %v825, 7
        %v827 = vsub.s32 1, %v826
        %v828 = vrot.slane %v819, %v827
        %v831 = vmul.f32 %v805, %v824
        %v832 = vmul.f32 %v806, %v828
        %vm833 = vcmask 785408
        %v834 = vsel %vm833, %v832, 0.0
        %v835 = vadd.f32 %v831, %v834
        %836 = vadd.xlane.f32.xlu0 %v835
        %v837 = vpop.xlane.xlu0 %836
        %vm838 = vcmask 7168
        %839 = vst.msk [vmem:[%s274] sm:$0xff] %vm838, %v837
        %v840 = vmul.f32 %v831, %v805
        %v841 = vmul.f32 %v832, %v806
        %v842 = vsel %vm833, %v841, 0.0
        %v843 = vadd.f32 %v840, %v842
        %844 = vadd.xlane.f32.xlu0 %v843
        %v845 = vpop.xlane.xlu0 %844
        %846 = vst.msk [vmem:[%s278] sm:$0xff] %vm838, %v845
        %s847 = sand.u32 %s100, 1
        %s848 = scalar_lea.sflag [#allocation4], %s847
        %s849 = sand.u32 %s100, 1
        %s850 = smul.addr %s849, 8
        %s851 = scalar_lea.vmem [#allocation7], %s850
        %p852 = scmp.lt.s32.totalorder %s24, 1
        %s853 = scalar_select %p852, %s24, 1
        %s854 = smul.addr %s853, 8
        %s855 = scalar_lea.vmem %s4, %s854
        %p856 = scmp.lt.s32.totalorder %s24, 1
        %s857 = scalar_select %p856, %s24, 1
        %s858 = smul.addr %s857, 8
        %s859 = scalar_lea.vmem %s5, %s858
        // Predicated region
        $region41: #{tpu_custom_call.1} parent=31 // pred_check
          %p860 = pneg %p110
        $region42: #{tpu_custom_call.1} parent=31 // pred_check_branch
          %862 = sbr.rel (%p860) target = $region44
        $region43: #{tpu_custom_call.1} parent=31 // pred_region
          %s864 = ssub.s32 128, 128
          %865 = vsyncadd %s848, %s864
          %s866 = smul.addr %s24, 2
          %s867 = smul.addr %s866, 64
          %s868 = scalar_lea.hbm %s3, %s867
          %s870 = sshll.u32 %s851, 4
          %s871 = int_to_ptr.vmem [resolvable:$true] %s870
          %873 = dma.vmem_to_hbm [thread:$0]  %s871, 128, %s868, %s848
        $region44: #{tpu_custom_call.1} parent=31 // pred_fallthru
          _
        // Predicated region
        $region45: #{tpu_custom_call.1} parent=31 // pred_check
          %p874 = pneg %p136
        $region46: #{tpu_custom_call.1} parent=31 // pred_check_branch
          %876 = sbr.rel (%p874) target = $region48
        $region47: #{tpu_custom_call.1} parent=31 // pred_region
          _
        $region48: #{tpu_custom_call.1} parent=31 // pred_fallthru
          _
        // Predicated region
        $region49: #{tpu_custom_call.1} parent=31 // pred_check
          %p877 = pneg %p162
        $region50: #{tpu_custom_call.1} parent=31 // pred_check_branch
          %879 = sbr.rel (%p877) target = $region52
        $region51: #{tpu_custom_call.1} parent=31 // pred_region
          _
        $region52: #{tpu_custom_call.1} parent=31 // pred_fallthru
          _
      $region32: #{tpu_custom_call.1} parent=5 // pred_fallthru
        _
      %p880 = scmp.le.s32.totalorder 2, %s19
      // Predicated region
      $region53: #{tpu_custom_call.1} parent=5 // pred_check
        %p881 = pneg %p880
      $region54: #{tpu_custom_call.1} parent=5 // pred_check_branch
        %883 = sbr.rel (%p881) target = $region56
      $region55: #{tpu_custom_call.1} parent=5 // pred_region
        %s884 = ssub.s32 %s19, 2
        // Predicated region
        $region57: #{tpu_custom_call.1} parent=55 // pred_check
          %p885 = pneg %p116
        $region58: #{tpu_custom_call.1} parent=55 // pred_check_branch
          %887 = sbr.rel (%p885) target = $region60
        $region59: #{tpu_custom_call.1} parent=55 // pred_region
          %s888 = sand.u32 %s101, 1
          %s889 = scalar_lea.sflag [#allocation4], %s888
          %s890 = sand.u32 %s101, 1
          %s891 = smul.addr %s890, 8
          %s892 = scalar_lea.vmem [#allocation7], %s891
          %893 = dma.done %s889, 128
        $region60: #{tpu_custom_call.1} parent=55 // pred_fallthru
          _
        // Predicated region
        $region61: #{tpu_custom_call.1} parent=55 // pred_check
          %p894 = pneg %p142
        $region62: #{tpu_custom_call.1} parent=55 // pred_check_branch
          %896 = sbr.rel (%p894) target = $region64
        $region63: #{tpu_custom_call.1} parent=55 // pred_region
          %p897 = scmp.lt.s32.totalorder %s25, 1
          %s898 = scalar_select %p897, %s25, 1
          %s899 = smul.addr %s898, 8
          %s900 = scalar_lea.vmem %s4, %s899
        $region64: #{tpu_custom_call.1} parent=55 // pred_fallthru
          _
        // Predicated region
        $region65: #{tpu_custom_call.1} parent=55 // pred_check
          %p901 = pneg %p168
        $region66: #{tpu_custom_call.1} parent=55 // pred_check_branch
          %903 = sbr.rel (%p901) target = $region68
        $region67: #{tpu_custom_call.1} parent=55 // pred_region
          %p904 = scmp.lt.s32.totalorder %s25, 1
          %s905 = scalar_select %p904, %s25, 1
          %s906 = smul.addr %s905, 8
          %s907 = scalar_lea.vmem %s5, %s906
        $region68: #{tpu_custom_call.1} parent=55 // pred_fallthru
          _
      $region56: #{tpu_custom_call.1} parent=5 // pred_fallthru
        _
    $region6: #{tpu_custom_call.1} parent=1 // loop_footer
      %s23 = sadd.s32 1, %s19
    $region7: #{tpu_custom_call.1} parent=1 // loop_footer_branch
      %18 = sbr.rel target = $region3
    $region8: #{tpu_custom_call.1} parent=1 // loop_exit
      _
    %908 = vsyncpa [#allocation3], 1
    %s909 = scalar_lea.sflag [#allocation3], 1
    %910 = vsyncpa %s909, 1
    %911 = vsyncpa [#allocation6], 1
    %912 = vsyncpa [#allocation4], 1
    %s913 = scalar_lea.sflag [#allocation4], 1
    %914 = vsyncpa %s913, 1

</llo_original>
